<compile_context>
chip_gen: v7x
topology: tpu7x:2x2x1
jax: 0.10.0
libtpu: 0.0.40
codegen_flags: <defaults>
</compile_context>

<pallas_src>
import jax
import jax.numpy as jnp
from jax.experimental import pallas as pl
from jax.experimental.pallas import tpu as pltpu

MIN_NUMBER = -1e32


# ----------------------------------------------------------------------------
# Kernels
# ----------------------------------------------------------------------------
def _matmul_bias_kernel(x_ref, w_ref, bias_ref, o_ref, acc_ref):
    """o = x @ w + bias, accumulated over the K grid axis in f32."""
    k = pl.program_id(2)

    @pl.when(k == 0)
    def _():
        acc_ref[...] = jnp.zeros_like(acc_ref)

    acc_ref[...] += jnp.dot(x_ref[...], w_ref[...],
                            preferred_element_type=jnp.float32)

    @pl.when(k == pl.num_programs(2) - 1)
    def _():
        o_ref[...] = (acc_ref[...] + bias_ref[...]).astype(o_ref.dtype)


def _matmul_bias_xterm_kernel(x_ref, w_ref, bias_ref, xterm_ref, inv_ref,
                              o_ref, acc_ref):
    """euclidean3: o = x @ w + bias + (-0.5*||x||^2) * (1/||y||)."""
    k = pl.program_id(2)

    @pl.when(k == 0)
    def _():
        acc_ref[...] = jnp.zeros_like(acc_ref)

    acc_ref[...] += jnp.dot(x_ref[...], w_ref[...],
                            preferred_element_type=jnp.float32)

    @pl.when(k == pl.num_programs(2) - 1)
    def _():
        o_ref[...] = (acc_ref[...] + bias_ref[...]
                      + xterm_ref[...] * inv_ref[...]).astype(o_ref.dtype)


# ----------------------------------------------------------------------------
# Tiling helpers
# ----------------------------------------------------------------------------
def _round_up(n, m):
    return ((n + m - 1) // m) * m


def _vmem_budget():
    """~75% of physical VMEM, with headroom; works on v5e/v6e/v7x."""
    cap = 64 * 1024 * 1024
    try:
        cap = int(getattr(pltpu.get_tpu_info(), "vmem_capacity_bytes", cap))
    except Exception:
        pass
    return max(int(min(cap * 3 // 4, cap - (16 << 20))), 24 << 20)


def _pick_tile(n, cap, align):
    """Largest tile (multiple of align, <= cap) minimizing round-up waste of n,
    searched within [cap/2, cap]."""
    n_al = _round_up(n, align)
    cap = max(align, (cap // align) * align)
    if n_al <= cap:
        return n_al
    lo = max(align, (cap // 2 // align) * align)
    best_t, best_waste = cap, _round_up(n_al, cap) - n
    t = cap - align
    while t >= lo:
        waste = _round_up(n_al, t) - n
        if waste < best_waste:
            best_t, best_waste = t, waste
        t -= align
    return best_t


def _choose_tiles(M, O, H, xb, wb, budget, sub_x):
    """Pick (tm, tn, tk, H_pad) so the double-buffered working set fits VMEM."""

    def fits(tm, tn, tk):
        need = (2 * tm * tk * xb        # x tile (double-buffered)
                + 2 * tk * tn * wb      # w tile (double-buffered)
                + tm * tn * 4           # f32 accumulator scratch
                + 2 * tm * tn * 4       # output tile (double-buffered)
                + 2 * (2 * tn * 4)      # bias + inv_norm rows
                + 2 * tm * 4)           # -0.5*||x||^2 column
        return need <= budget

    O_al = _round_up(O, 128)

    tm_opts, cap = [], 512
    while cap >= sub_x:
        t = _pick_tile(M, cap, sub_x)
        if t not in tm_opts:
            tm_opts.append(t)
        cap //= 2

    tn_opts, cap = [O_al], 512          # full label table first (residency)
    while cap >= 128:
        t = _pick_tile(O, cap, 128)
        if t not in tn_opts:
            tn_opts.append(t)
        cap //= 2

    # Pass 1: full-K (tk == H, no H padding / extra HBM copies of x).
    for tm in tm_opts:
        for tn in tn_opts:
            if fits(tm, tn, H):
                return tm, tn, H, H
    # Pass 2: K-tiled (tk multiple of 128, H zero-padded).
    for tk in (2048, 1024, 512, 256, 128):
        for tm in tm_opts:
            for tn in tn_opts:
                if fits(tm, tn, tk):
                    return tm, tn, tk, _round_up(H, tk)
    # Last resort: smallest legal tiles.
    return sub_x, 128, 128, _round_up(H, 128)


# ----------------------------------------------------------------------------
# Wrapper (forward pass)
# ----------------------------------------------------------------------------
def matching_classifier(encoder_hiddens, label_embeddings, masked_output=None,
                        matching_similarity_function="dot",
                        out_dtype=jnp.float32):
    """Pallas equivalent of MatchingClassifier.forward (shared (O, H) label table)."""
    sim = matching_similarity_function.lower()
    x = encoder_hiddens
    y = label_embeddings
    if y.ndim != 2:
        # TODO(synk): per-batch label embeddings (y of shape B*O*H) not wired;
        # only the shared (O, H) table is supported.
        raise NotImplementedError("only 2-D label_embeddings (O, H) supported")

    squeeze = x.ndim == 2
    if squeeze:
        B, H = x.shape
        L = 1
    else:
        B, L, H = x.shape
    O, Hy = y.shape
    assert H == Hy, "hidden dims must match"
    M = B * L
    x2 = x.reshape(M, H)

    # --- label-side precompute (plain JAX, once per call, not per grid step) ---
    y32 = y.astype(jnp.float32)
    inv_norm = None
    if sim == "dot":
        w = y
        bias = jnp.zeros((O,), jnp.float32)
    elif sim == "euclidean":
        w = y
        bias = -0.5 * jnp.sum(y32 * y32, axis=-1)
    elif sim == "euclidean2":
        norm_y = jnp.sqrt(jnp.sum(y32 * y32, axis=-1))
        w = (y32 / (norm_y[:, None] + 1e-5)).astype(y.dtype)
        bias = -0.5 * norm_y
    elif sim == "euclidean3":
        norm_y = jnp.sqrt(jnp.sum(y32 * y32, axis=-1))
        w = (y32 / norm_y[:, None]).astype(y.dtype)
        bias = -0.5 * norm_y
        inv_norm = 1.0 / norm_y
    else:
        raise ValueError(f"unknown similarity function: {sim}")

    # Fold index_fill_(-1, masked_output, MIN_NUMBER) into the bias; zero the
    # masked weight rows (and 1/||y||) so masked logits are exactly MIN_NUMBER.
    if masked_output is not None:
        idx = jnp.asarray(masked_output)
        mrow = jnp.zeros((O,), jnp.bool_).at[idx].set(True)
        bias = jnp.where(mrow, MIN_NUMBER, bias)
        w = jnp.where(mrow[:, None], jnp.zeros_like(w), w)
        if inv_norm is not None:
            inv_norm = jnp.where(mrow, 0.0, inv_norm)

    # euclidean3: hoist -0.5*||x||^2 out of the O loop (computed once per row).
    xterm = None
    if inv_norm is not None:
        x32 = x2.astype(jnp.float32)
        xterm = -0.5 * jnp.sum(x32 * x32, axis=-1, keepdims=True)   # (M, 1) f32

    # --- tile sizing (generation-aware, VMEM-budgeted) ---
    xb = jnp.dtype(x.dtype).itemsize
    wb = jnp.dtype(w.dtype).itemsize
    sub_x = {1: 32, 2: 16}.get(xb, 8)          # packed sublane tile of x dtype
    budget = _vmem_budget()
    tm, tn, tk, H_pad = _choose_tiles(M, O, H, xb, wb, budget, sub_x)

    O_pad = _round_up(O, tn)
    # If the grid would collapse to a single (i, j) tile, split M in two so both
    # v7x TensorCores get work (only when it adds no extra padding).
    M_al = _round_up(M, sub_x)
    if (_round_up(M, tm) // tm) == 1 and (O_pad // tn) == 1 \
            and M_al % (2 * sub_x) == 0 and M_al // 2 >= sub_x:
        tm = M_al // 2
    M_pad = _round_up(M, tm)

    # --- pad only when needed (avoid extra HBM copies of x) ---
    if M_pad == M and H_pad == H:
        x_p = x2
    else:
        x_p = jnp.pad(x2, ((0, M_pad - M), (0, H_pad - H)))

    w_t = jnp.transpose(w)                                   # (H, O), once
    if H_pad == H and O_pad == O:
        w_p = w_t
    else:
        w_p = jnp.pad(w_t, ((0, H_pad - H), (0, O_pad - O)))

    bias_p = jnp.pad(bias.astype(jnp.float32), (0, O_pad - O)).reshape(1, O_pad)

    in_specs = [
        pl.BlockSpec((tm, tk), lambda i, j, k: (i, k)),      # x row/K tile
        pl.BlockSpec((tk, tn), lambda i, j, k: (k, j)),      # w (pre-transposed)
        pl.BlockSpec((1, tn), lambda i, j, k: (0, j)),       # per-label bias
    ]
    args = [x_p, w_p, bias_p]
    kernel = _matmul_bias_kernel
    if inv_norm is not None:
        xterm_p = xterm if M_pad == M else jnp.pad(xterm, ((0, M_pad - M), (0, 0)))
        inv_p = jnp.pad(inv_norm.astype(jnp.float32), (0, O_pad - O)).reshape(1, O_pad)
        in_specs += [
            pl.BlockSpec((tm, 1), lambda i, j, k: (i, 0)),   # -0.5*||x||^2
            pl.BlockSpec((1, tn), lambda i, j, k: (0, j)),   # 1/||y||
        ]
        args += [xterm_p, inv_p]
        kernel = _matmul_bias_xterm_kernel

    grid_spec = pltpu.PrefetchScalarGridSpec(
        num_scalar_prefetch=0,
        grid=(M_pad // tm, O_pad // tn, H_pad // tk),
        in_specs=in_specs,
        out_specs=pl.BlockSpec((tm, tn), lambda i, j, k: (i, j)),
        scratch_shapes=[pltpu.VMEM((tm, tn), jnp.float32)],
    )

    out = pl.pallas_call(
        kernel,
        out_shape=jax.ShapeDtypeStruct((M_pad, O_pad), out_dtype),
        grid_spec=grid_spec,
        compiler_params=pltpu.CompilerParams(
            dimension_semantics=("parallel", "parallel", "arbitrary"),
            vmem_limit_bytes=int(budget)),
    )(*args)

    out = out[:M, :O]
    return out.reshape(B, O) if squeeze else out.reshape(B, L, O)


# ----------------------------------------------------------------------------
# Pure-JAX reference mirroring the PyTorch forward (2-D y case)
# ----------------------------------------------------------------------------
def _reference(x, y, masked_output, sim):
    squeeze = False
    if x.ndim == 2:
        x = x[:, None, :]
        squeeze = True
    if sim == "dot":
        logits = x @ y.T
    elif sim == "euclidean":
        logits = x @ y.T - jnp.linalg.norm(y, axis=-1)[None, None, :] ** 2 / 2
    elif sim == "euclidean2":
        norm_y = jnp.linalg.norm(y, axis=-1)
        unit_y = y / (norm_y[:, None] + 1e-5)
        logits = x @ unit_y.T - norm_y[None, None, :] / 2
    elif sim == "euclidean3":
        norm_y = jnp.linalg.norm(y, axis=-1)
        unit_y = y / norm_y[:, None]
        logits = (x @ unit_y.T - norm_y[None, None, :] / 2
                  - (jnp.linalg.norm(x, axis=-1) ** 2)[:, :, None]
                  / norm_y[None, None, :] / 2)
    if squeeze:
        logits = logits[:, 0, :]
    if masked_output is not None:
        logits = logits.at[..., jnp.asarray(masked_output)].set(MIN_NUMBER)
    return logits


if __name__ == "__main__":
    B, L, H, O = 2, 8, 32, 16
    key = jax.random.PRNGKey(0)
    kx, ky = jax.random.split(key)
    encoder_hiddens = jax.random.normal(kx, (B, L, H), dtype=jnp.float32)
    label_embeddings = jax.random.normal(ky, (O, H), dtype=jnp.float32)
    masked_output = jnp.array([3, 7], dtype=jnp.int32)

    ok = True
    for sim in ("dot", "euclidean", "euclidean2", "euclidean3"):
        got = matching_classifier(encoder_hiddens, label_embeddings,
                                  masked_output=masked_output,
                                  matching_similarity_function=sim)
        got = jax.block_until_ready(got)
        want = _reference(encoder_hiddens, label_embeddings, masked_output, sim)
        ok &= bool(jnp.allclose(got, want, rtol=1e-4, atol=1e-4))

    # 2D (B, H) input path with the default 'dot' similarity, no mask.
    got2 = matching_classifier(encoder_hiddens[:, 0, :], label_embeddings)
    got2 = jax.block_until_ready(got2)
    want2 = _reference(encoder_hiddens[:, 0, :], label_embeddings, None, "dot")
    ok &= bool(jnp.allclose(got2, want2, rtol=1e-4, atol=1e-4))
    assert got2.shape == (B, O)

    if ok:
        print("KERNEL_OK")
</pallas_src>

<mosaic_0001>
module attributes {stable_mosaic.version = 11 : i64} {
  func.func @_matmul_bias_kernel(%arg0: i32, %arg1: i32, %arg2: i32, %arg3: memref<8x32xf32, #tpu.memory_space<vmem>>, %arg4: memref<32x128xf32, #tpu.memory_space<vmem>>, %arg5: memref<1x128xf32, #tpu.memory_space<vmem>>, %arg6: memref<8x128xf32, #tpu.memory_space<vmem>>, %arg7: memref<8x128xf32, #tpu.memory_space<vmem>>) attributes {dimension_semantics = [#tpu.dimension_semantics<parallel>, #tpu.dimension_semantics<parallel>, #tpu.dimension_semantics<arbitrary>], iteration_bounds = array<i64: 2, 1, 1>, scalar_prefetch = 0 : i64, scratch_operands = 1 : i64, tpu.core_type = #tpu.core_type<tc>, window_params = [{transform_indices = @transform_0, window_bounds = array<i64: 8, 32>}, {transform_indices = @transform_1, window_bounds = array<i64: 32, 128>}, {transform_indices = @transform_2, window_bounds = array<i64: 1, 128>}, {transform_indices = @transform_3, window_bounds = array<i64: 8, 128>}]} {
    %c0_i32 = arith.constant 0 : i32
    %0 = arith.cmpi eq, %arg2, %c0_i32 : i32
    %1 = arith.extui %0 : i1 to i32
    %c0_i32_0 = arith.constant 0 : i32
    %2 = arith.cmpi ne, %1, %c0_i32_0 : i32
    scf.if %2 {
      %cst_10 = arith.constant 0.000000e+00 : f32
      %12 = vector.broadcast %cst_10 : f32 to vector<8x128xf32>
      %c0_11 = arith.constant 0 : index
      %c0_12 = arith.constant 0 : index
      %13 = vector.load %arg7[%c0_11, %c0_12] : memref<8x128xf32, #tpu.memory_space<vmem>>, vector<8x128xf32>
      tpu.vector_store %arg7[%c0_11, %c0_12], %12 {strides = array<i32>} : memref<8x128xf32, #tpu.memory_space<vmem>>, vector<8x128xf32>,
    } else {
    }
    %c0 = arith.constant 0 : index
    %c0_1 = arith.constant 0 : index
    %3 = vector.load %arg7[%c0, %c0_1] : memref<8x128xf32, #tpu.memory_space<vmem>>, vector<8x128xf32>
    %c0_2 = arith.constant 0 : index
    %c0_3 = arith.constant 0 : index
    %4 = vector.load %arg3[%c0_2, %c0_3] : memref<8x32xf32, #tpu.memory_space<vmem>>, vector<8x32xf32>
    %c0_4 = arith.constant 0 : index
    %c0_5 = arith.constant 0 : index
    %5 = vector.load %arg4[%c0_4, %c0_5] : memref<32x128xf32, #tpu.memory_space<vmem>>, vector<32x128xf32>
    %cst = arith.constant dense<0.000000e+00> : vector<8x128xf32>
    %6 = tpu.matmul %4, %5, %cst {dimension_numbers = #tpu.dot_dimension_numbers<[1], [0], [0], [1], [0, 0, 1, 1], [], []>} : vector<8x32xf32>, vector<32x128xf32>, vector<8x128xf32> -> vector<8x128xf32>
    %7 = arith.addf %3, %6 : vector<8x128xf32>
    %c0_6 = arith.constant 0 : index
    %c0_7 = arith.constant 0 : index
    %8 = vector.load %arg7[%c0_6, %c0_7] : memref<8x128xf32, #tpu.memory_space<vmem>>, vector<8x128xf32>
    tpu.vector_store %arg7[%c0_6, %c0_7], %7 {strides = array<i32>} : memref<8x128xf32, #tpu.memory_space<vmem>>, vector<8x128xf32>,
    %c0_i32_8 = arith.constant 0 : i32
    %9 = arith.cmpi eq, %arg2, %c0_i32_8 : i32
    %10 = arith.extui %9 : i1 to i32
    %c0_i32_9 = arith.constant 0 : i32
    %11 = arith.cmpi ne, %10, %c0_i32_9 : i32
    scf.if %11 {
      %c0_10 = arith.constant 0 : index
      %c0_11 = arith.constant 0 : index
      %12 = vector.load %arg7[%c0_10, %c0_11] : memref<8x128xf32, #tpu.memory_space<vmem>>, vector<8x128xf32>
      %c0_12 = arith.constant 0 : index
      %c0_13 = arith.constant 0 : index
      %13 = vector.load %arg5[%c0_12, %c0_13] : memref<1x128xf32, #tpu.memory_space<vmem>>, vector<1x128xf32>
      %14 = vector.broadcast %13 : vector<1x128xf32> to vector<8x128xf32>
      %15 = arith.addf %12, %14 : vector<8x128xf32>
      %c0_14 = arith.constant 0 : index
      %c0_15 = arith.constant 0 : index
      %16 = vector.load %arg6[%c0_14, %c0_15] : memref<8x128xf32, #tpu.memory_space<vmem>>, vector<8x128xf32>
      tpu.vector_store %arg6[%c0_14, %c0_15], %15 {strides = array<i32>} : memref<8x128xf32, #tpu.memory_space<vmem>>, vector<8x128xf32>,
    } else {
    }
    return
  }
  func.func @transform_0(%arg0: i32, %arg1: i32, %arg2: i32) -> (i32, i32) {
    %c0_i32 = arith.constant 0 : i32
    return %arg0, %arg2 : i32, i32
  }
  func.func @transform_1(%arg0: i32, %arg1: i32, %arg2: i32) -> (i32, i32) {
    %c0_i32 = arith.constant 0 : i32
    return %arg2, %arg1 : i32, i32
  }
  func.func @transform_2(%arg0: i32, %arg1: i32, %arg2: i32) -> (i32, i32) {
    %c0_i32 = arith.constant 0 : i32
    %c0_i32_0 = arith.constant 0 : i32
    return %c0_i32, %arg1 : i32, i32
  }
  func.func @transform_3(%arg0: i32, %arg1: i32, %arg2: i32) -> (i32, i32) {
    %c0_i32 = arith.constant 0 : i32
    return %arg0, %arg1 : i32, i32
  }
}

</mosaic_0001>

<llo_original>
// kernel: tpu_custom_call.1
$region0: #{tpu_custom_call.1}
  #allocation0 [shape = 'u32[]', space=smem, size = 0x4, offset = 0x4, fixed_abs, tag = 'smem constant byte address 0x4 - core index']
  #allocation1 [shape = 'u32[144,128]{1,0:T(1,128)}', space=vmem, size = 0x12000, scoped, tag = 'internal scratch']
  #allocation2 [shape = 'f32[8,128]{1,0:T(8,128)}', space=vmem, size = 0x1000, scoped, tag = 'scratch operand']
  %s0 = inlined_call_operand.hbm [shape: f32[16,32], index: 0, kind: input, shape index: {}]
  %s1 = inlined_call_operand.hbm [shape: f32[32,128], index: 1, kind: input, shape index: {}]
  %s2 = inlined_call_operand.vmem [shape: f32[1,128], index: 2, kind: input, shape index: {}]
  %s3 = inlined_call_operand.hbm [shape: f32[16,128], index: 3, kind: output, shape index: {}]
  %s4 = sld [smem:[#allocation0]]
  $region61: #{tpu_custom_call.1} parent=0
    _
  %s6 = ssub.s32 1, %s4
  %s7 = scalar_select 0, %s6, %s4
  $region1: #{tpu_custom_call.1} parent=0
    #allocation3 [shape = 'u8[8192]{0}', space=vmem, size = 0x2000, scoped, tag = 'input window, operand 0']
    #allocation4 [shape = 's32[2]{0}', space=sflag, size = 0x8, scoped, tag = 'scoped memory for tpu_custom_call.1']
    #allocation5 [shape = 's32[2]{0}', space=sflag, size = 0x8, scoped, tag = 'scoped memory for tpu_custom_call.1']
    #allocation6 [shape = 'u8[16384]{0}', space=vmem, size = 0x4000, scoped, tag = 'input window, operand 1, single buffered']
    #allocation7 [shape = 's32[1]{0}', space=sflag, size = 0x4, scoped, tag = 'scoped memory for tpu_custom_call.1']
    #allocation8 [shape = 'u8[8192]{0}', space=vmem, size = 0x2000, scoped, tag = 'output window, operand 0']
    %8 = vsyncpa [#allocation4], 0
    %s9 = scalar_lea.sflag [#allocation4], 1
    %10 = vsyncpa %s9, 0
    %11 = vsyncpa [#allocation7], 0
    %12 = vsyncpa [#allocation5], 0
    %s13 = scalar_lea.sflag [#allocation5], 1
    %14 = vsyncpa %s13, 0
    loop: start=0, step=1, limit=4
    $region2: #{tpu_custom_call.1} parent=1 // loop_pre_header
      _
    $region3: #{tpu_custom_call.1} parent=1 // loop_header
      %s16 = sphi 0, %s20
      %p17 = scmp.ge.s32.totalorder %s16, 4
      %s23 = sphi 0, %s42
      %s24 = sphi 0, %s38
      %s25 = sphi 0, %s34
      %s26 = sphi 0, %s23
      %s27 = sphi 0, %s24
      %s28 = sphi 0, %s25
      %s29 = sphi 0, %s26
      %s30 = sphi 0, %s27
      %s31 = sphi 0, %s28
      %s47 = sphi 0, %s49
      %s50 = sphi 0, %s47
      %s51 = sphi 0, %s50
      %s67 = sphi 0, %s51
      %s75 = sphi 0, %s77
      %s78 = sphi 0, %s75
      %s79 = sphi 0, %s78
      %s95 = sphi 0, %s79
      %s101 = sphi 0, %s103
      %s104 = sphi 0, %s101
      %s105 = sphi 0, %s104
      %s121 = sphi 0, %s105
      %s129 = sphi 0, %s131
      %s132 = sphi 0, %s129
      %s133 = sphi 0, %s132
      %s149 = sphi 0, %s133
    $region4: #{tpu_custom_call.1} parent=1 // loop_header_branch
      %19 = sbr.rel (%p17) target = $region8
    $region5: #{tpu_custom_call.1} parent=1 // loop_body
      %s21 = ssub.s32 %s16, 1
      %s22 = ssub.s32 %s16, 2
      %s32 = sadd.s32 1, %s25
      %p33 = scmp.ge.s32.totalorder %s32, 1
      %s34 = scalar_select %p33, 0, %s32
      %s35 = sadd.s32 1, %s24
      %s36 = scalar_select %p33, %s35, %s24
      %p37 = scmp.ge.s32.totalorder %s36, 1
      %s38 = scalar_select %p37, 0, %s36
      %s39 = sadd.s32 1, %s23
      %s40 = scalar_select %p37, %s39, %s23
      %p41 = scmp.ge.s32.totalorder %s40, 2
      %s42 = scalar_select %p41, 0, %s40
      %s43 = ssub.s32 %s23, %s42
      %s44 = ssub.s32 %s25, %s34
      %s45 = sor.u32 %s43, %s44
      %p46 = scmp.eq.s32.totalorder %s45, 0
      %s48 = sadd.s32 %s47, 1
      %s49 = scalar_select %p46, %s47, %s48
      %p52 = pneg %p46
      %p53 = scmp.eq.s32.totalorder %s16, 1
      %p54 = por %p52, %p53
      %p55 = scmp.ne.s32.totalorder %s47, %s50
      %p56 = scmp.eq.s32.totalorder %s16, 0
      %p57 = por %p55, %p56
      %p58 = scmp.ne.s32.totalorder %s47, %s50
      %p59 = scmp.eq.s32.totalorder %s21, 1
      %p60 = por %p58, %p59
      %p61 = scmp.ne.s32.totalorder %s50, %s51
      %p62 = scmp.eq.s32.totalorder %s21, 0
      %p63 = por %p61, %p62
      %p64 = scmp.ne.s32.totalorder %s50, %s51
      %p65 = scmp.eq.s32.totalorder %s22, 1
      %p66 = por %p64, %p65
      %p68 = scmp.ne.s32.totalorder %s51, %s67
      %p69 = scmp.eq.s32.totalorder %s22, 0
      %p70 = por %p68, %p69
      %s71 = ssub.s32 %s25, %s34
      %s72 = ssub.s32 %s24, %s38
      %s73 = sor.u32 %s71, %s72
      %p74 = scmp.eq.s32.totalorder %s73, 0
      %s76 = sadd.s32 %s75, 1
      %s77 = scalar_select %p74, %s75, %s76
      %p80 = pneg %p74
      %p81 = scmp.eq.s32.totalorder %s16, 1
      %p82 = por %p80, %p81
      %p83 = scmp.ne.s32.totalorder %s75, %s78
      %p84 = scmp.eq.s32.totalorder %s16, 0
      %p85 = por %p83, %p84
      %p86 = scmp.ne.s32.totalorder %s75, %s78
      %p87 = scmp.eq.s32.totalorder %s21, 1
      %p88 = por %p86, %p87
      %p89 = scmp.ne.s32.totalorder %s78, %s79
      %p90 = scmp.eq.s32.totalorder %s21, 0
      %p91 = por %p89, %p90
      %p92 = scmp.ne.s32.totalorder %s78, %s79
      %p93 = scmp.eq.s32.totalorder %s22, 1
      %p94 = por %p92, %p93
      %p96 = scmp.ne.s32.totalorder %s79, %s95
      %p97 = scmp.eq.s32.totalorder %s22, 0
      %p98 = por %p96, %p97
      %s99 = ssub.s32 %s24, %s38
      %p100 = scmp.eq.s32.totalorder %s99, 0
      %s102 = sadd.s32 %s101, 1
      %s103 = scalar_select %p100, %s101, %s102
      %p106 = pneg %p100
      %p107 = scmp.eq.s32.totalorder %s16, 1
      %p108 = por %p106, %p107
      %p109 = scmp.ne.s32.totalorder %s101, %s104
      %p110 = scmp.eq.s32.totalorder %s16, 0
      %p111 = por %p109, %p110
      %p112 = scmp.ne.s32.totalorder %s101, %s104
      %p113 = scmp.eq.s32.totalorder %s21, 1
      %p114 = por %p112, %p113
      %p115 = scmp.ne.s32.totalorder %s104, %s105
      %p116 = scmp.eq.s32.totalorder %s21, 0
      %p117 = por %p115, %p116
      %p118 = scmp.ne.s32.totalorder %s104, %s105
      %p119 = scmp.eq.s32.totalorder %s22, 1
      %p120 = por %p118, %p119
      %p122 = scmp.ne.s32.totalorder %s105, %s121
      %p123 = scmp.eq.s32.totalorder %s22, 0
      %p124 = por %p122, %p123
      %s125 = ssub.s32 %s23, %s42
      %s126 = ssub.s32 %s24, %s38
      %s127 = sor.u32 %s125, %s126
      %p128 = scmp.eq.s32.totalorder %s127, 0
      %s130 = sadd.s32 %s129, 1
      %s131 = scalar_select %p128, %s129, %s130
      %p134 = pneg %p128
      %p135 = scmp.eq.s32.totalorder %s16, 1
      %p136 = por %p134, %p135
      %p137 = scmp.ne.s32.totalorder %s129, %s132
      %p138 = scmp.eq.s32.totalorder %s16, 0
      %p139 = por %p137, %p138
      %p140 = scmp.ne.s32.totalorder %s129, %s132
      %p141 = scmp.eq.s32.totalorder %s21, 1
      %p142 = por %p140, %p141
      %p143 = scmp.ne.s32.totalorder %s132, %s133
      %p144 = scmp.eq.s32.totalorder %s21, 0
      %p145 = por %p143, %p144
      %p146 = scmp.ne.s32.totalorder %s132, %s133
      %p147 = scmp.eq.s32.totalorder %s22, 1
      %p148 = por %p146, %p147
      %p150 = scmp.ne.s32.totalorder %s133, %s149
      %p151 = scmp.eq.s32.totalorder %s22, 0
      %p152 = por %p150, %p151
      %p153 = scmp.le.s32.totalorder 1, %s16
      %p154 = scmp.lt.s32.totalorder %s16, 3
      %p155 = pnand %p153, %p154
      %p156 = pneg %p155
      // Predicated region
      $region9: #{tpu_custom_call.1} parent=5 // pred_check
        _
      $region10: #{tpu_custom_call.1} parent=5 // pred_check_branch
        %158 = sbr.rel (%p155) target = $region12
      $region11: #{tpu_custom_call.1} parent=5 // pred_region
        %s159 = ssub.s32 %s16, 1
        // Predicated region
        $region13: #{tpu_custom_call.1} parent=11 // pred_check
          %p160 = pneg %p91
        $region14: #{tpu_custom_call.1} parent=11 // pred_check_branch
          %162 = sbr.rel (%p160) target = $region16
        $region15: #{tpu_custom_call.1} parent=11 // pred_region
          %s163 = smul.u32 4, %s28
          %s165 = ssub.s32 512, 512
          %166 = vsyncadd [#allocation7], %s165
          %s167 = sadd.s32 %s27, %s163
          %s168 = smul.addr %s167, 128
          %s169 = scalar_lea.hbm %s1, %s168
          %s170 = sshll.u32 [#allocation6], 4
          %s171 = int_to_ptr.vmem [resolvable:$true] %s170
          %176 = dma.hbm_to_vmem [thread:$0]  %s169, 512, %s171, [#allocation7], 128, 128, 8
        $region16: #{tpu_custom_call.1} parent=11 // pred_fallthru
          _
        // Predicated region
        $region17: #{tpu_custom_call.1} parent=11 // pred_check
          %p177 = pneg %p117
        $region18: #{tpu_custom_call.1} parent=11 // pred_check_branch
          %179 = sbr.rel (%p177) target = $region20
        $region19: #{tpu_custom_call.1} parent=11 // pred_region
          %p180 = scmp.lt.s32.totalorder %s27, 0
          %s181 = scalar_select %p180, %s27, 0
          %s182 = scalar_lea.vmem %s2, %s181
        $region20: #{tpu_custom_call.1} parent=11 // pred_fallthru
          _
      $region12: #{tpu_custom_call.1} parent=5 // pred_fallthru
        _
      %p183 = scmp.lt.s32.totalorder %s16, 2
      // Predicated region
      $region21: #{tpu_custom_call.1} parent=5 // pred_check
        %p184 = pneg %p183
      $region22: #{tpu_custom_call.1} parent=5 // pred_check_branch
        %186 = sbr.rel (%p184) target = $region24
      $region23: #{tpu_custom_call.1} parent=5 // pred_region
        // Predicated region
        $region25: #{tpu_custom_call.1} parent=23 // pred_check
          %p187 = pneg %p57
        $region26: #{tpu_custom_call.1} parent=23 // pred_check_branch
          %189 = sbr.rel (%p187) target = $region28
        $region27: #{tpu_custom_call.1} parent=23 // pred_region
          %s190 = sand.u32 %s47, 1
          %s191 = scalar_lea.sflag [#allocation4], %s190
          %s192 = sand.u32 %s47, 1
          %s193 = smul.addr %s192, 8
          %s194 = scalar_lea.vmem [#allocation3], %s193
          %s196 = ssub.s32 128, 128
          %197 = vsyncadd %s191, %s196
          %s198 = sadd.s32 %s25, %s23
          %s199 = smul.addr %s198, 128
          %s200 = scalar_lea.hbm %s0, %s199
          %s202 = sshll.u32 %s194, 4
          %s203 = int_to_ptr.vmem [resolvable:$true] %s202
          %205 = dma.hbm_to_vmem [thread:$0]  %s200, 128, %s203, %s191
        $region28: #{tpu_custom_call.1} parent=23 // pred_fallthru
          _
      $region24: #{tpu_custom_call.1} parent=5 // pred_fallthru
        _
      %p206 = scmp.le.s32.totalorder 1, %s16
      %p207 = scmp.lt.s32.totalorder %s16, 3
      %p208 = pnand %p206, %p207
      %p209 = pneg %p208
      // Predicated region
      $region29: #{tpu_custom_call.1} parent=5 // pred_check
        _
      $region30: #{tpu_custom_call.1} parent=5 // pred_check_branch
        %211 = sbr.rel (%p208) target = $region32
      $region31: #{tpu_custom_call.1} parent=5 // pred_region
        %s212 = ssub.s32 %s16, 1
        %s213 = sand.u32 %s50, 1
        %s214 = scalar_lea.sflag [#allocation4], %s213
        %s215 = sand.u32 %s50, 1
        %s216 = smul.addr %s215, 8
        %s217 = scalar_lea.vmem [#allocation3], %s216
        // Predicated region
        $region33: #{tpu_custom_call.1} parent=31 // pred_check
          %p218 = pneg %p63
        $region34: #{tpu_custom_call.1} parent=31 // pred_check_branch
          %220 = sbr.rel (%p218) target = $region36
        $region35: #{tpu_custom_call.1} parent=31 // pred_region
          %221 = dma.done %s214, 128
        $region36: #{tpu_custom_call.1} parent=31 // pred_fallthru
          _
        // Predicated region
        $region37: #{tpu_custom_call.1} parent=31 // pred_check
          %p222 = pneg %p91
        $region38: #{tpu_custom_call.1} parent=31 // pred_check_branch
          %224 = sbr.rel (%p222) target = $region40
        $region39: #{tpu_custom_call.1} parent=31 // pred_region
          %225 = dma.done [#allocation7], 512
        $region40: #{tpu_custom_call.1} parent=31 // pred_fallthru
          _
        %s226 = sand.u32 %s50, 1
        %s227 = scalar_lea.sflag [#allocation4], %s226
        %s228 = sand.u32 %s50, 1
        %s229 = smul.addr %s228, 8
        %s230 = scalar_lea.vmem [#allocation3], %s229
        %p231 = pneg %p63
        %p232 = pneg %p60
        %p233 = pneg %p91
        %p234 = pneg %p88
        %p235 = scmp.lt.s32.totalorder %s27, 0
        %s236 = scalar_select %p235, %s27, 0
        %s237 = scalar_lea.vmem %s2, %s236
        %p238 = pneg %p117
        %p239 = pneg %p114
        %p240 = pneg %p145
        %p241 = pneg %p142
        %s242 = sand.u32 %s132, 1
        %s243 = scalar_lea.sflag [#allocation5], %s242
        %s244 = sand.u32 %s132, 1
        %s245 = smul.addr %s244, 8
        %s246 = scalar_lea.vmem [#allocation8], %s245
        %s247 = smul.u32 4, %s28
        %p248 = scmp.lt.s32.totalorder %s27, 0
        %s249 = scalar_select %p248, %s27, 0
        %s250 = scalar_lea.vmem %s2, %s249
        %p251 = scmp.eq.s32.totalorder %s28, 0
        // Predicated region
        $region41: #{tpu_custom_call.1} parent=31 // pred_check
          %p252 = pneg %p251
        $region42: #{tpu_custom_call.1} parent=31 // pred_check_branch
          %254 = sbr.rel (%p252) target = $region44
        $region43: #{tpu_custom_call.1} parent=31 // pred_region
          %255 = vst [vmem:[#allocation2] sm:$0xff] 0.0
        $region44: #{tpu_custom_call.1} parent=31 // pred_fallthru
          _
        %v256 = vld [vmem:[#allocation2] sm:$0xff]
        %v257 = vld [vmem:[%s217] sm:$0xff]
        %v258 = vld [vmem:[#allocation6] sm:$0xff]
        %v259 = vld [vmem:[#allocation6 + $0x8] sm:$0xff]
        %v260 = vld [vmem:[#allocation6 + $0x10] sm:$0xff]
        %v261 = vld [vmem:[#allocation6 + $0x18] sm:$0xff]
        %vm262 = vcmask 261120
        %v264 = vsel %vm262, %v257, 0
        %266 = vmatprep.subr.mxu0 0.0
        %267 = vmatpush1.msra.mxu0 %v258
        %268 = vmatprep.subr.mxu0 0.0
        %269 = vmatpush1.msra.mxu0 %v259
        %270 = vmatprep.subr.mxu0 0.0
        %271 = vmatpush1.msra.mxu0 %v260
        %272 = vmatprep.subr.mxu0 0.0
        %273 = vmatpush1.msra.mxu0 %v261
        %274 = vmatprep.subr.mxu0 0.0
        %275 = vmatpush1.msra.mxu0 0.0
        %276 = vmatprep.subr.mxu0 0.0
        %277 = vmatpush1.msra.mxu0 0.0
        %278 = vmatprep.subr.mxu0 0.0
        %279 = vmatpush1.msra.mxu0 0.0
        %280 = vmatprep.subr.mxu0 0.0
        %281 = vmatpush1.msra.mxu0 0.0
        %282 = vmatprep.subr.mxu0 0.0
        %283 = vmatpush1.msra.mxu0 0.0
        %284 = vmatprep.subr.mxu0 0.0
        %285 = vmatpush1.msra.mxu0 0.0
        %286 = vmatprep.subr.mxu0 0.0
        %287 = vmatpush1.msra.mxu0 0.0
        %288 = vmatprep.subr.mxu0 0.0
        %289 = vmatpush1.msra.mxu0 0.0
        %290 = vmatprep.subr.mxu0 0.0
        %291 = vmatpush1.msra.mxu0 0.0
        %292 = vmatprep.subr.mxu0 0.0
        %293 = vmatpush1.msra.mxu0 0.0
        %294 = vmatprep.subr.mxu0 0.0
        %295 = vmatpush1.msra.mxu0 0.0
        %296 = vmatprep.subr.mxu0 0.0
        %297 = vmatpush1.msra.mxu0 0.0
        %298 = vmatprep.subr.mxu0 0.0
        %299 = vmatpush1.msra.mxu0 0.0
        %300 = vmatprep.subr.mxu0 0.0
        %301 = vmatpush1.msra.mxu0 0.0
        %302 = vmatprep.subr.mxu0 0.0
        %303 = vmatpush1.msra.mxu0 0.0
        %304 = vmatprep.subr.mxu0 0.0
        %305 = vmatpush1.msra.mxu0 0.0
        %306 = vmatprep.subr.mxu0 0.0
        %307 = vmatpush1.msra.mxu0 0.0
        %308 = vmatprep.subr.mxu0 0.0
        %309 = vmatpush1.msra.mxu0 0.0
        %310 = vmatprep.subr.mxu0 0.0
        %311 = vmatpush1.msra.mxu0 0.0
        %312 = vmatprep.subr.mxu0 0.0
        %313 = vmatpush1.msra.mxu0 0.0
        %314 = vmatprep.subr.mxu0 0.0
        %315 = vmatpush1.msra.mxu0 0.0
        %316 = vmatprep.subr.mxu0 0.0
        %317 = vmatpush1.msra.mxu0 0.0
        %318 = vmatprep.subr.mxu0 0.0
        %319 = vmatpush1.msra.mxu0 0.0
        %320 = vmatprep.subr.mxu0 0.0
        %321 = vmatpush1.msra.mxu0 0.0
        %322 = vmatprep.subr.mxu0 0.0
        %323 = vmatpush1.msra.mxu0 0.0
        %324 = vmatprep.subr.mxu0 0.0
        %325 = vmatpush1.msra.mxu0 0.0
        %326 = vmatprep.subr.mxu0 0.0
        %327 = vmatpush1.msra.mxu0 0.0
        %328 = vmatprep.subr.mxu0 0.0
        %329 = vmatpush1.msra.mxu0 0.0
        %330 = vmatprep.mubr.f32.mxu0 0.0
        %331 = vmatmul.mubr.f32.gmra.mrb[0].mxu0 %v264
        %v332 = vpop.f32.mrb[0].mxu0
        %v333 = vadd.f32 0.0, %v332
        %v334 = vpop.f32.mrb[0].mxu0
        %335 = vdwg.mxu0
        %v336 = vadd.f32 %v256, %v333
        %337 = vst [vmem:[#allocation2] sm:$0xff] %v336
        // Predicated region
        $region45: #{tpu_custom_call.1} parent=31 // pred_check
          %p338 = pneg %p251
        $region46: #{tpu_custom_call.1} parent=31 // pred_check_branch
          %340 = sbr.rel (%p338) target = $region48
        $region47: #{tpu_custom_call.1} parent=31 // pred_region
          %v341 = vld [vmem:[#allocation2] sm:$0xff]
          %v342 = vld [vmem:[%s250] sm:$0x1]
          %v344 = vlaneseq
          %v345 = vshrl.u32 %v344, 7
          %v346 = vsub.s32 0, %v345
          %v347 = vrot.slane %v342, %v346
          %v349 = vadd.f32 %v341, %v347
          %350 = vst [vmem:[%s246] sm:$0xff] %v349
        $region48: #{tpu_custom_call.1} parent=31 // pred_fallthru
          _
        %s351 = sand.u32 %s132, 1
        %s352 = scalar_lea.sflag [#allocation5], %s351
        %s353 = sand.u32 %s132, 1
        %s354 = smul.addr %s353, 8
        %s355 = scalar_lea.vmem [#allocation8], %s354
        // Predicated region
        $region49: #{tpu_custom_call.1} parent=31 // pred_check
          %p356 = pneg %p142
        $region50: #{tpu_custom_call.1} parent=31 // pred_check_branch
          %358 = sbr.rel (%p356) target = $region52
        $region51: #{tpu_custom_call.1} parent=31 // pred_region
          %s360 = ssub.s32 128, 128
          %361 = vsyncadd %s352, %s360
          %s362 = sadd.s32 %s27, %s26
          %s363 = smul.addr %s362, 128
          %s364 = scalar_lea.hbm %s3, %s363
          %s366 = sshll.u32 %s355, 4
          %s367 = int_to_ptr.vmem [resolvable:$true] %s366
          %369 = dma.vmem_to_hbm [thread:$0]  %s367, 128, %s364, %s352
        $region52: #{tpu_custom_call.1} parent=31 // pred_fallthru
          _
      $region32: #{tpu_custom_call.1} parent=5 // pred_fallthru
        _
      %p370 = scmp.le.s32.totalorder 2, %s16
      // Predicated region
      $region53: #{tpu_custom_call.1} parent=5 // pred_check
        %p371 = pneg %p370
      $region54: #{tpu_custom_call.1} parent=5 // pred_check_branch
        %373 = sbr.rel (%p371) target = $region56
      $region55: #{tpu_custom_call.1} parent=5 // pred_region
        %s374 = ssub.s32 %s16, 2
        // Predicated region
        $region57: #{tpu_custom_call.1} parent=55 // pred_check
          %p375 = pneg %p148
        $region58: #{tpu_custom_call.1} parent=55 // pred_check_branch
          %377 = sbr.rel (%p375) target = $region60
        $region59: #{tpu_custom_call.1} parent=55 // pred_region
          %s378 = sand.u32 %s133, 1
          %s379 = scalar_lea.sflag [#allocation5], %s378
          %s380 = sand.u32 %s133, 1
          %s381 = smul.addr %s380, 8
          %s382 = scalar_lea.vmem [#allocation8], %s381
          %383 = dma.done %s379, 128
        $region60: #{tpu_custom_call.1} parent=55 // pred_fallthru
          _
      $region56: #{tpu_custom_call.1} parent=5 // pred_fallthru
        _
    $region6: #{tpu_custom_call.1} parent=1 // loop_footer
      %s20 = sadd.s32 1, %s16
    $region7: #{tpu_custom_call.1} parent=1 // loop_footer_branch
      %15 = sbr.rel target = $region3
    $region8: #{tpu_custom_call.1} parent=1 // loop_exit
      _
    %384 = vsyncpa [#allocation4], 1
    %s385 = scalar_lea.sflag [#allocation4], 1
    %386 = vsyncpa %s385, 1
    %387 = vsyncpa [#allocation7], 1
    %388 = vsyncpa [#allocation5], 1
    %s389 = scalar_lea.sflag [#allocation5], 1
    %390 = vsyncpa %s389, 1

</llo_original>
